<compile_context>
chip_gen: v6e
topology: v6e:2x2x1
jax: 0.10.0
libtpu: 0.0.40
codegen_flags: <defaults>
</compile_context>

<pallas_src>
import functools

import jax
import jax.numpy as jnp
from jax import lax
from jax.experimental import pallas as pl
from jax.experimental.pallas import tpu as pltpu


def _round_up(n, m):
    return ((n + m - 1) // m) * m


def _softplus(z):
    # numerically stable softplus: max(z, 0) + log1p(exp(-|z|))
    return jnp.maximum(z, 0.0) + jnp.log1p(jnp.exp(-jnp.abs(z)))


def actor_kernel(x_ref, w1_ref, b1_ref, w2_ref, b2_ref, wh_ref, bh_ref,
                 out_ref, *, action_dim):
    """One batch tile: fused 3-matmul MLP, both heads in one (TB, 2A) slab."""
    x = x_ref[...]

    # fc1 + relu  (MXU in operand dtype, f32 accumulate; bias/relu in f32)
    h1 = jnp.dot(x, w1_ref[...], preferred_element_type=jnp.float32) + b1_ref[...]
    h1 = jnp.maximum(h1, 0.0)

    # fc2 + relu
    h2 = jnp.dot(h1.astype(w2_ref.dtype), w2_ref[...],
                 preferred_element_type=jnp.float32) + b2_ref[...]
    h2 = jnp.maximum(h2, 0.0)

    # fused heads: lanes [0, A) -> mean head, lanes [A, 2A) -> std head.
    # z is only (TB, 2A) wide: no padded-lane EUP work, 16x less writeback.
    z = jnp.dot(h2.astype(wh_ref.dtype), wh_ref[...],
                preferred_element_type=jnp.float32) + bh_ref[...]

    mean = jnp.tanh(z) * 2.0
    std = jnp.clip(_softplus(z) + 0.001, 0.01, 1.0)

    # single-row lane mask, broadcast by the where()
    lane = lax.broadcasted_iota(jnp.int32, (1, z.shape[1]), 1)
    out_ref[...] = jnp.where(lane < action_dim, mean, std).astype(out_ref.dtype)


def actor_forward(x, params, *, tb=2048, min_tiles=2, use_bf16=True):
    """x: (B, state_dim) f32. params: dict of unpadded weights/biases.

    Returns (mean, std), each (B, action_dim) f32.
    """
    B, S = x.shape
    H = params["w1"].shape[1]
    A = params["wm"].shape[1]

    HP = _round_up(H, 128)   # hidden dim padded to full lanes (matmul inner dim)
    NA = 2 * A               # fused head output width, stored UNpadded

    # Balanced batch tiling:
    #   * at least `min_tiles` grid steps (so v7x's 2 TCs both get work),
    #   * tiles sized to cdiv(B, n_tiles) so padding waste is < 8 rows/tile,
    #   * capped at tb (VMEM-safe on v7x's 64 MiB).
    n_tiles = max(pl.cdiv(B, tb), min_tiles)
    TB = min(tb, _round_up(pl.cdiv(B, n_tiles), 8))
    B_pad = _round_up(B, TB)

    mm_dtype = jnp.bfloat16 if use_bf16 else jnp.float32

    def pad2(a, shape):
        return jnp.zeros(shape, a.dtype).at[: a.shape[0], : a.shape[1]].set(a)

    # Zero-padding the hidden dim is semantically neutral: padded hidden lanes
    # stay 0 through relu and contribute nothing to downstream matmuls.
    w1 = pad2(params["w1"], (S, HP)).astype(mm_dtype)
    b1 = pad2(params["b1"], (1, HP)).astype(jnp.float32)
    w2 = pad2(params["w2"], (HP, HP)).astype(mm_dtype)
    b2 = pad2(params["b2"], (1, HP)).astype(jnp.float32)
    wh = pad2(jnp.concatenate([params["wm"], params["ws"]], axis=1),
              (HP, NA)).astype(mm_dtype)
    bh = jnp.concatenate([params["bm"], params["bs"]], axis=1).astype(jnp.float32)

    xp = jnp.zeros((B_pad, S), jnp.float32).at[:B, :].set(x).astype(mm_dtype)

    kern = functools.partial(actor_kernel, action_dim=A)

    out = pl.pallas_call(
        kern,
        out_shape=jax.ShapeDtypeStruct((B_pad, NA), jnp.float32),
        grid_spec=pltpu.PrefetchScalarGridSpec(
            num_scalar_prefetch=0,
            grid=(B_pad // TB,),
            in_specs=[
                pl.BlockSpec((TB, S), lambda i: (i, 0)),    # x tile (pipelined)
                pl.BlockSpec((S, HP), lambda i: (0, 0)),    # w1 (VMEM resident)
                pl.BlockSpec((1, HP), lambda i: (0, 0)),    # b1
                pl.BlockSpec((HP, HP), lambda i: (0, 0)),   # w2
                pl.BlockSpec((1, HP), lambda i: (0, 0)),    # b2
                pl.BlockSpec((HP, NA), lambda i: (0, 0)),   # fused head weights
                pl.BlockSpec((1, NA), lambda i: (0, 0)),    # fused head biases
            ],
            out_specs=pl.BlockSpec((TB, NA), lambda i: (i, 0)),
        ),
        compiler_params=pltpu.CompilerParams(
            dimension_semantics=("parallel",),  # batch tiles shard across TCs on v7x
        ),
    )(xp, w1, b1, w2, b2, wh, bh)

    mean = out[:B, :A]
    std = out[:B, A:NA]
    return mean, std


def init_params(key, state_dim, action_dim, hidden_dim):
    """Deterministic torch-Linear-style init (uniform +/- 1/sqrt(fan_in))."""
    ks = jax.random.split(key, 8)

    def linear(kw, kb, fan_in, fan_out):
        bound = 1.0 / jnp.sqrt(float(fan_in))
        w = jax.random.uniform(kw, (fan_in, fan_out), jnp.float32, -bound, bound)
        b = jax.random.uniform(kb, (1, fan_out), jnp.float32, -bound, bound)
        return w, b

    w1, b1 = linear(ks[0], ks[1], state_dim, hidden_dim)
    w2, b2 = linear(ks[2], ks[3], hidden_dim, hidden_dim)
    wm, bm = linear(ks[4], ks[5], hidden_dim, action_dim)
    ws, bs = linear(ks[6], ks[7], hidden_dim, action_dim)
    return dict(w1=w1, b1=b1, w2=w2, b2=b2, wm=wm, bm=bm, ws=ws, bs=bs)


def actor_forward_ref(x, p):
    """Plain-JAX reference for correctness check."""
    h1 = jnp.maximum(x @ p["w1"] + p["b1"], 0.0)
    h2 = jnp.maximum(h1 @ p["w2"] + p["b2"], 0.0)
    mean = jnp.tanh(h2 @ p["wm"] + p["bm"]) * 2.0
    std = jnp.clip(jax.nn.softplus(h2 @ p["ws"] + p["bs"]) + 0.001, 0.01, 1.0)
    return mean, std


if __name__ == "__main__":
    # Small shapes consistent with the module: state_dim=8, hidden=32, action_dim=4.
    B, state_dim, action_dim, hidden_dim = 16, 8, 4, 32

    key = jax.random.PRNGKey(0)
    kx, kp = jax.random.split(key)
    x = jax.random.normal(kx, (B, state_dim), dtype=jnp.float32)
    params = init_params(kp, state_dim, action_dim, hidden_dim)

    mean_ref, std_ref = actor_forward_ref(x, params)

    # 1) exact f32 MXU path: tight tolerance
    mean32, std32 = actor_forward(x, params, use_bf16=False)
    jax.block_until_ready((mean32, std32))
    assert mean32.shape == (B, action_dim) and std32.shape == (B, action_dim)
    assert jnp.allclose(mean32, mean_ref, atol=1e-5, rtol=1e-5)
    assert jnp.allclose(std32, std_ref, atol=1e-5, rtol=1e-5)

    # 2) default bf16-operand path (f32 accumulate + f32 elementwise): loose tolerance
    mean16, std16 = actor_forward(x, params)
    jax.block_until_ready((mean16, std16))
    assert mean16.shape == (B, action_dim) and std16.shape == (B, action_dim)
    assert jnp.allclose(mean16, mean_ref, atol=3e-2, rtol=3e-2)
    assert jnp.allclose(std16, std_ref, atol=3e-2, rtol=3e-2)

    print("KERNEL_OK")
</pallas_src>

<mosaic_0001>
module attributes {stable_mosaic.version = 11 : i64} {
  func.func @actor_kernel(%arg0: i32, %arg1: memref<8x8xf32, #tpu.memory_space<vmem>>, %arg2: memref<8x128xf32, #tpu.memory_space<vmem>>, %arg3: memref<1x128xf32, #tpu.memory_space<vmem>>, %arg4: memref<128x128xf32, #tpu.memory_space<vmem>>, %arg5: memref<1x128xf32, #tpu.memory_space<vmem>>, %arg6: memref<128x8xf32, #tpu.memory_space<vmem>>, %arg7: memref<1x8xf32, #tpu.memory_space<vmem>>, %arg8: memref<8x8xf32, #tpu.memory_space<vmem>>) attributes {dimension_semantics = [#tpu.dimension_semantics<parallel>], iteration_bounds = array<i64: 2>, scalar_prefetch = 0 : i64, scratch_operands = 0 : i64, tpu.core_type = #tpu.core_type<tc>, window_params = [{transform_indices = @transform_0, window_bounds = array<i64: 8, 8>}, {pipeline_mode = #tpu.pipeline_mode<synchronous>, transform_indices = @transform_1, window_bounds = array<i64: 8, 128>}, {pipeline_mode = #tpu.pipeline_mode<synchronous>, transform_indices = @transform_2, window_bounds = array<i64: 1, 128>}, {pipeline_mode = #tpu.pipeline_mode<synchronous>, transform_indices = @transform_3, window_bounds = array<i64: 128, 128>}, {pipeline_mode = #tpu.pipeline_mode<synchronous>, transform_indices = @transform_4, window_bounds = array<i64: 1, 128>}, {pipeline_mode = #tpu.pipeline_mode<synchronous>, transform_indices = @transform_5, window_bounds = array<i64: 128, 8>}, {pipeline_mode = #tpu.pipeline_mode<synchronous>, transform_indices = @transform_6, window_bounds = array<i64: 1, 8>}, {transform_indices = @transform_7, window_bounds = array<i64: 8, 8>}]} {
    %c0 = arith.constant 0 : index
    %c0_0 = arith.constant 0 : index
    %0 = vector.load %arg1[%c0, %c0_0] : memref<8x8xf32, #tpu.memory_space<vmem>>, vector<8x8xf32>
    %c0_1 = arith.constant 0 : index
    %c0_2 = arith.constant 0 : index
    %1 = vector.load %arg2[%c0_1, %c0_2] : memref<8x128xf32, #tpu.memory_space<vmem>>, vector<8x128xf32>
    %cst = arith.constant dense<0.000000e+00> : vector<8x128xf32>
    %2 = tpu.matmul %0, %1, %cst {dimension_numbers = #tpu.dot_dimension_numbers<[1], [0], [0], [1], [0, 0, 1, 1], [], []>} : vector<8x8xf32>, vector<8x128xf32>, vector<8x128xf32> -> vector<8x128xf32>
    %c0_3 = arith.constant 0 : index
    %c0_4 = arith.constant 0 : index
    %3 = vector.load %arg3[%c0_3, %c0_4] : memref<1x128xf32, #tpu.memory_space<vmem>>, vector<1x128xf32>
    %4 = vector.broadcast %3 : vector<1x128xf32> to vector<8x128xf32>
    %5 = arith.addf %2, %4 : vector<8x128xf32>
    %cst_5 = arith.constant 0.000000e+00 : f32
    %6 = vector.broadcast %cst_5 : f32 to vector<8x128xf32>
    %7 = arith.maximumf %5, %6 : vector<8x128xf32>
    %c0_6 = arith.constant 0 : index
    %c0_7 = arith.constant 0 : index
    %8 = vector.load %arg4[%c0_6, %c0_7] : memref<128x128xf32, #tpu.memory_space<vmem>>, vector<128x128xf32>
    %cst_8 = arith.constant dense<0.000000e+00> : vector<8x128xf32>
    %9 = tpu.matmul %7, %8, %cst_8 {dimension_numbers = #tpu.dot_dimension_numbers<[1], [0], [0], [1], [0, 0, 1, 1], [], []>} : vector<8x128xf32>, vector<128x128xf32>, vector<8x128xf32> -> vector<8x128xf32>
    %c0_9 = arith.constant 0 : index
    %c0_10 = arith.constant 0 : index
    %10 = vector.load %arg5[%c0_9, %c0_10] : memref<1x128xf32, #tpu.memory_space<vmem>>, vector<1x128xf32>
    %11 = vector.broadcast %10 : vector<1x128xf32> to vector<8x128xf32>
    %12 = arith.addf %9, %11 : vector<8x128xf32>
    %cst_11 = arith.constant 0.000000e+00 : f32
    %13 = vector.broadcast %cst_11 : f32 to vector<8x128xf32>
    %14 = arith.maximumf %12, %13 : vector<8x128xf32>
    %c0_12 = arith.constant 0 : index
    %c0_13 = arith.constant 0 : index
    %15 = vector.load %arg6[%c0_12, %c0_13] : memref<128x8xf32, #tpu.memory_space<vmem>>, vector<128x8xf32>
    %cst_14 = arith.constant dense<0.000000e+00> : vector<8x8xf32>
    %16 = tpu.matmul %14, %15, %cst_14 {dimension_numbers = #tpu.dot_dimension_numbers<[1], [0], [0], [1], [0, 0, 1, 1], [], []>} : vector<8x128xf32>, vector<128x8xf32>, vector<8x8xf32> -> vector<8x8xf32>
    %c0_15 = arith.constant 0 : index
    %c0_16 = arith.constant 0 : index
    %17 = vector.load %arg7[%c0_15, %c0_16] : memref<1x8xf32, #tpu.memory_space<vmem>>, vector<1x8xf32>
    %18 = vector.broadcast %17 : vector<1x8xf32> to vector<8x8xf32>
    %19 = arith.addf %16, %18 : vector<8x8xf32>
    %20 = math.tanh %19 : vector<8x8xf32>
    %cst_17 = arith.constant 2.000000e+00 : f32
    %21 = vector.broadcast %cst_17 : f32 to vector<8x8xf32>
    %22 = arith.mulf %20, %21 : vector<8x8xf32>
    %cst_18 = arith.constant 0.000000e+00 : f32
    %23 = vector.broadcast %cst_18 : f32 to vector<8x8xf32>
    %24 = arith.maximumf %19, %23 : vector<8x8xf32>
    %25 = math.absf %19 : vector<8x8xf32>
    %cst_19 = arith.constant 0.000000e+00 : f32
    %26 = vector.broadcast %cst_19 : f32 to vector<8x8xf32>
    %27 = arith.subf %26, %25 : vector<8x8xf32>
    %28 = math.exp %27 : vector<8x8xf32>
    %29 = math.log1p %28 : vector<8x8xf32>
    %30 = arith.addf %24, %29 : vector<8x8xf32>
    %cst_20 = arith.constant 1.000000e-03 : f32
    %31 = vector.broadcast %cst_20 : f32 to vector<8x8xf32>
    %32 = arith.addf %30, %31 : vector<8x8xf32>
    %cst_21 = arith.constant 0.00999999977 : f32
    %cst_22 = arith.constant 1.000000e+00 : f32
    %33 = vector.broadcast %cst_21 : f32 to vector<8x8xf32>
    %34 = arith.maximumf %33, %32 : vector<8x8xf32>
    %35 = vector.broadcast %cst_22 : f32 to vector<8x8xf32>
    %36 = arith.minimumf %35, %34 : vector<8x8xf32>
    %37 = tpu.iota {dimensions = array<i32: 1>} : vector<1x8xi32>
    %c4_i32 = arith.constant 4 : i32
    %38 = vector.broadcast %c4_i32 : i32 to vector<1x8xi32>
    %39 = arith.cmpi slt, %37, %38 : vector<1x8xi32>
    %40 = vector.shape_cast %39 : vector<1x8xi1> to vector<1x8xi1>
    %41 = vector.broadcast %40 : vector<1x8xi1> to vector<8x8xi1>
    %42 = arith.select %41, %22, %36 : vector<8x8xi1>, vector<8x8xf32>
    %c0_23 = arith.constant 0 : index
    %c0_24 = arith.constant 0 : index
    %43 = vector.load %arg8[%c0_23, %c0_24] : memref<8x8xf32, #tpu.memory_space<vmem>>, vector<8x8xf32>
    tpu.vector_store %arg8[%c0_23, %c0_24], %42 {strides = array<i32>} : memref<8x8xf32, #tpu.memory_space<vmem>>, vector<8x8xf32>,
    return
  }
  func.func @transform_0(%arg0: i32) -> (i32, i32) {
    %c0_i32 = arith.constant 0 : i32
    %c0_i32_0 = arith.constant 0 : i32
    return %arg0, %c0_i32 : i32, i32
  }
  func.func @transform_1(%arg0: i32) -> (i32, i32) {
    %c0_i32 = arith.constant 0 : i32
    %c0_i32_0 = arith.constant 0 : i32
    %c0_i32_1 = arith.constant 0 : i32
    return %c0_i32, %c0_i32_0 : i32, i32
  }
  func.func @transform_2(%arg0: i32) -> (i32, i32) {
    %c0_i32 = arith.constant 0 : i32
    %c0_i32_0 = arith.constant 0 : i32
    %c0_i32_1 = arith.constant 0 : i32
    return %c0_i32, %c0_i32_0 : i32, i32
  }
  func.func @transform_3(%arg0: i32) -> (i32, i32) {
    %c0_i32 = arith.constant 0 : i32
    %c0_i32_0 = arith.constant 0 : i32
    %c0_i32_1 = arith.constant 0 : i32
    return %c0_i32, %c0_i32_0 : i32, i32
  }
  func.func @transform_4(%arg0: i32) -> (i32, i32) {
    %c0_i32 = arith.constant 0 : i32
    %c0_i32_0 = arith.constant 0 : i32
    %c0_i32_1 = arith.constant 0 : i32
    return %c0_i32, %c0_i32_0 : i32, i32
  }
  func.func @transform_5(%arg0: i32) -> (i32, i32) {
    %c0_i32 = arith.constant 0 : i32
    %c0_i32_0 = arith.constant 0 : i32
    %c0_i32_1 = arith.constant 0 : i32
    return %c0_i32, %c0_i32_0 : i32, i32
  }
  func.func @transform_6(%arg0: i32) -> (i32, i32) {
    %c0_i32 = arith.constant 0 : i32
    %c0_i32_0 = arith.constant 0 : i32
    %c0_i32_1 = arith.constant 0 : i32
    return %c0_i32, %c0_i32_0 : i32, i32
  }
  func.func @transform_7(%arg0: i32) -> (i32, i32) {
    %c0_i32 = arith.constant 0 : i32
    %c0_i32_0 = arith.constant 0 : i32
    return %arg0, %c0_i32 : i32, i32
  }
}

</mosaic_0001>

<llo_original>
// kernel: tpu_custom_call.1
$region0: #{tpu_custom_call.1}
  #allocation0 [shape = 'u32[]', space=smem, size = 0x4, offset = 0x4, fixed_abs, tag = 'smem constant byte address 0x4 - core index']
  #allocation1 [shape = 'u32[144,128]{1,0:T(1,128)}', space=vmem, size = 0x12000, scoped, tag = 'internal scratch']
  %s0 = inlined_call_operand.vmem [shape: f32[16,8], index: 0, kind: input, shape index: {}]
  %s1 = inlined_call_operand.vmem [shape: f32[8,128], index: 1, kind: input, shape index: {}]
  %s2 = inlined_call_operand.vmem [shape: f32[1,128], index: 2, kind: input, shape index: {}]
  %s3 = inlined_call_operand.vmem [shape: f32[128,128], index: 3, kind: input, shape index: {}]
  %s4 = inlined_call_operand.vmem [shape: f32[1,128], index: 4, kind: input, shape index: {}]
  %s5 = inlined_call_operand.vmem [shape: f32[128,8], index: 5, kind: input, shape index: {}]
  %s6 = inlined_call_operand.vmem [shape: f32[1,8], index: 6, kind: input, shape index: {}]
  %s7 = inlined_call_operand.vmem [shape: f32[16,8], index: 7, kind: output, shape index: {}]
  %s8 = sld [smem:[#allocation0]]
  $region61: #{tpu_custom_call.1} parent=0
    _
  %s10 = ssub.s32 1, %s8
  %s11 = scalar_select 0, %s10, %s8
  loop: start=0, step=1, limit=4
  $region2: #{tpu_custom_call.1} parent=0 // loop_pre_header
    _
  $region3: #{tpu_custom_call.1} parent=0 // loop_header
    %s13 = sphi 0, %s17
    %p14 = scmp.ge.s32.totalorder %s13, 4
    %s23 = sphi 0, %s25
    %s26 = sphi 0, %s23
    %s27 = sphi 0, %s26
    %s43 = sphi 0, %s27
    %s47 = sphi 0, %s47
    %s49 = sphi 0, %s47
    %s50 = sphi 0, %s49
    %s64 = sphi 0, %s50
    %s68 = sphi 0, %s68
    %s70 = sphi 0, %s68
    %s71 = sphi 0, %s70
    %s85 = sphi 0, %s71
    %s89 = sphi 0, %s89
    %s91 = sphi 0, %s89
    %s92 = sphi 0, %s91
    %s106 = sphi 0, %s92
    %s110 = sphi 0, %s110
    %s112 = sphi 0, %s110
    %s113 = sphi 0, %s112
    %s127 = sphi 0, %s113
    %s131 = sphi 0, %s131
    %s133 = sphi 0, %s131
    %s134 = sphi 0, %s133
    %s148 = sphi 0, %s134
    %s152 = sphi 0, %s152
    %s154 = sphi 0, %s152
    %s155 = sphi 0, %s154
    %s169 = sphi 0, %s155
    %s175 = sphi 0, %s177
    %s178 = sphi 0, %s175
    %s179 = sphi 0, %s178
    %s195 = sphi 0, %s179
  $region4: #{tpu_custom_call.1} parent=0 // loop_header_branch
    %16 = sbr.rel (%p14) target = $region8
  $region5: #{tpu_custom_call.1} parent=0 // loop_body
    %s18 = ssub.s32 %s13, 1
    %s19 = ssub.s32 %s13, 2
    %s20 = sadd.s32 %s13, 1
    %s21 = ssub.s32 %s13, %s20
    %p22 = scmp.eq.s32.totalorder %s21, 0
    %s24 = sadd.s32 %s23, 1
    %s25 = scalar_select %p22, %s23, %s24
    %p28 = pneg %p22
    %p29 = scmp.eq.s32.totalorder %s13, 1
    %p30 = por %p28, %p29
    %p31 = scmp.ne.s32.totalorder %s23, %s26
    %p32 = scmp.eq.s32.totalorder %s13, 0
    %p33 = por %p31, %p32
    %p34 = scmp.ne.s32.totalorder %s23, %s26
    %p35 = scmp.eq.s32.totalorder %s18, 1
    %p36 = por %p34, %p35
    %p37 = scmp.ne.s32.totalorder %s26, %s27
    %p38 = scmp.eq.s32.totalorder %s18, 0
    %p39 = por %p37, %p38
    %p40 = scmp.ne.s32.totalorder %s26, %s27
    %p41 = scmp.eq.s32.totalorder %s19, 1
    %p42 = por %p40, %p41
    %p44 = scmp.ne.s32.totalorder %s27, %s43
    %p45 = scmp.eq.s32.totalorder %s19, 0
    %p46 = por %p44, %p45
    %s48 = sadd.s32 %s47, 1
    %p51 = scmp.eq.s32.totalorder %s13, 1
    %p52 = scmp.ne.s32.totalorder %s47, %s49
    %p53 = scmp.eq.s32.totalorder %s13, 0
    %p54 = por %p52, %p53
    %p55 = scmp.ne.s32.totalorder %s47, %s49
    %p56 = scmp.eq.s32.totalorder %s18, 1
    %p57 = por %p55, %p56
    %p58 = scmp.ne.s32.totalorder %s49, %s50
    %p59 = scmp.eq.s32.totalorder %s18, 0
    %p60 = por %p58, %p59
    %p61 = scmp.ne.s32.totalorder %s49, %s50
    %p62 = scmp.eq.s32.totalorder %s19, 1
    %p63 = por %p61, %p62
    %p65 = scmp.ne.s32.totalorder %s50, %s64
    %p66 = scmp.eq.s32.totalorder %s19, 0
    %p67 = por %p65, %p66
    %s69 = sadd.s32 %s68, 1
    %p72 = scmp.eq.s32.totalorder %s13, 1
    %p73 = scmp.ne.s32.totalorder %s68, %s70
    %p74 = scmp.eq.s32.totalorder %s13, 0
    %p75 = por %p73, %p74
    %p76 = scmp.ne.s32.totalorder %s68, %s70
    %p77 = scmp.eq.s32.totalorder %s18, 1
    %p78 = por %p76, %p77
    %p79 = scmp.ne.s32.totalorder %s70, %s71
    %p80 = scmp.eq.s32.totalorder %s18, 0
    %p81 = por %p79, %p80
    %p82 = scmp.ne.s32.totalorder %s70, %s71
    %p83 = scmp.eq.s32.totalorder %s19, 1
    %p84 = por %p82, %p83
    %p86 = scmp.ne.s32.totalorder %s71, %s85
    %p87 = scmp.eq.s32.totalorder %s19, 0
    %p88 = por %p86, %p87
    %s90 = sadd.s32 %s89, 1
    %p93 = scmp.eq.s32.totalorder %s13, 1
    %p94 = scmp.ne.s32.totalorder %s89, %s91
    %p95 = scmp.eq.s32.totalorder %s13, 0
    %p96 = por %p94, %p95
    %p97 = scmp.ne.s32.totalorder %s89, %s91
    %p98 = scmp.eq.s32.totalorder %s18, 1
    %p99 = por %p97, %p98
    %p100 = scmp.ne.s32.totalorder %s91, %s92
    %p101 = scmp.eq.s32.totalorder %s18, 0
    %p102 = por %p100, %p101
    %p103 = scmp.ne.s32.totalorder %s91, %s92
    %p104 = scmp.eq.s32.totalorder %s19, 1
    %p105 = por %p103, %p104
    %p107 = scmp.ne.s32.totalorder %s92, %s106
    %p108 = scmp.eq.s32.totalorder %s19, 0
    %p109 = por %p107, %p108
    %s111 = sadd.s32 %s110, 1
    %p114 = scmp.eq.s32.totalorder %s13, 1
    %p115 = scmp.ne.s32.totalorder %s110, %s112
    %p116 = scmp.eq.s32.totalorder %s13, 0
    %p117 = por %p115, %p116
    %p118 = scmp.ne.s32.totalorder %s110, %s112
    %p119 = scmp.eq.s32.totalorder %s18, 1
    %p120 = por %p118, %p119
    %p121 = scmp.ne.s32.totalorder %s112, %s113
    %p122 = scmp.eq.s32.totalorder %s18, 0
    %p123 = por %p121, %p122
    %p124 = scmp.ne.s32.totalorder %s112, %s113
    %p125 = scmp.eq.s32.totalorder %s19, 1
    %p126 = por %p124, %p125
    %p128 = scmp.ne.s32.totalorder %s113, %s127
    %p129 = scmp.eq.s32.totalorder %s19, 0
    %p130 = por %p128, %p129
    %s132 = sadd.s32 %s131, 1
    %p135 = scmp.eq.s32.totalorder %s13, 1
    %p136 = scmp.ne.s32.totalorder %s131, %s133
    %p137 = scmp.eq.s32.totalorder %s13, 0
    %p138 = por %p136, %p137
    %p139 = scmp.ne.s32.totalorder %s131, %s133
    %p140 = scmp.eq.s32.totalorder %s18, 1
    %p141 = por %p139, %p140
    %p142 = scmp.ne.s32.totalorder %s133, %s134
    %p143 = scmp.eq.s32.totalorder %s18, 0
    %p144 = por %p142, %p143
    %p145 = scmp.ne.s32.totalorder %s133, %s134
    %p146 = scmp.eq.s32.totalorder %s19, 1
    %p147 = por %p145, %p146
    %p149 = scmp.ne.s32.totalorder %s134, %s148
    %p150 = scmp.eq.s32.totalorder %s19, 0
    %p151 = por %p149, %p150
    %s153 = sadd.s32 %s152, 1
    %p156 = scmp.eq.s32.totalorder %s13, 1
    %p157 = scmp.ne.s32.totalorder %s152, %s154
    %p158 = scmp.eq.s32.totalorder %s13, 0
    %p159 = por %p157, %p158
    %p160 = scmp.ne.s32.totalorder %s152, %s154
    %p161 = scmp.eq.s32.totalorder %s18, 1
    %p162 = por %p160, %p161
    %p163 = scmp.ne.s32.totalorder %s154, %s155
    %p164 = scmp.eq.s32.totalorder %s18, 0
    %p165 = por %p163, %p164
    %p166 = scmp.ne.s32.totalorder %s154, %s155
    %p167 = scmp.eq.s32.totalorder %s19, 1
    %p168 = por %p166, %p167
    %p170 = scmp.ne.s32.totalorder %s155, %s169
    %p171 = scmp.eq.s32.totalorder %s19, 0
    %p172 = por %p170, %p171
    %s173 = ssub.s32 %s13, %s20
    %p174 = scmp.eq.s32.totalorder %s173, 0
    %s176 = sadd.s32 %s175, 1
    %s177 = scalar_select %p174, %s175, %s176
    %p180 = pneg %p174
    %p181 = scmp.eq.s32.totalorder %s13, 1
    %p182 = por %p180, %p181
    %p183 = scmp.ne.s32.totalorder %s175, %s178
    %p184 = scmp.eq.s32.totalorder %s13, 0
    %p185 = por %p183, %p184
    %p186 = scmp.ne.s32.totalorder %s175, %s178
    %p187 = scmp.eq.s32.totalorder %s18, 1
    %p188 = por %p186, %p187
    %p189 = scmp.ne.s32.totalorder %s178, %s179
    %p190 = scmp.eq.s32.totalorder %s18, 0
    %p191 = por %p189, %p190
    %p192 = scmp.ne.s32.totalorder %s178, %s179
    %p193 = scmp.eq.s32.totalorder %s19, 1
    %p194 = por %p192, %p193
    %p196 = scmp.ne.s32.totalorder %s179, %s195
    %p197 = scmp.eq.s32.totalorder %s19, 0
    %p198 = por %p196, %p197
    %p199 = scmp.le.s32.totalorder 1, %s13
    %p200 = scmp.lt.s32.totalorder %s13, 3
    %p201 = pnand %p199, %p200
    %p202 = pneg %p201
    // Predicated region
    $region9: #{tpu_custom_call.1} parent=5 // pred_check
      _
    $region10: #{tpu_custom_call.1} parent=5 // pred_check_branch
      %204 = sbr.rel (%p201) target = $region12
    $region11: #{tpu_custom_call.1} parent=5 // pred_region
      %s205 = ssub.s32 %s13, 1
      // Predicated region
      $region13: #{tpu_custom_call.1} parent=11 // pred_check
        %p206 = pneg %p60
      $region14: #{tpu_custom_call.1} parent=11 // pred_check_branch
        %208 = sbr.rel (%p206) target = $region16
      $region15: #{tpu_custom_call.1} parent=11 // pred_region
        _
      $region16: #{tpu_custom_call.1} parent=11 // pred_fallthru
        _
      // Predicated region
      $region17: #{tpu_custom_call.1} parent=11 // pred_check
        %p209 = pneg %p81
      $region18: #{tpu_custom_call.1} parent=11 // pred_check_branch
        %211 = sbr.rel (%p209) target = $region20
      $region19: #{tpu_custom_call.1} parent=11 // pred_region
        _
      $region20: #{tpu_custom_call.1} parent=11 // pred_fallthru
        _
      // Predicated region
      $region21: #{tpu_custom_call.1} parent=11 // pred_check
        %p212 = pneg %p102
      $region22: #{tpu_custom_call.1} parent=11 // pred_check_branch
        %214 = sbr.rel (%p212) target = $region24
      $region23: #{tpu_custom_call.1} parent=11 // pred_region
        _
      $region24: #{tpu_custom_call.1} parent=11 // pred_fallthru
        _
      // Predicated region
      $region25: #{tpu_custom_call.1} parent=11 // pred_check
        %p215 = pneg %p123
      $region26: #{tpu_custom_call.1} parent=11 // pred_check_branch
        %217 = sbr.rel (%p215) target = $region28
      $region27: #{tpu_custom_call.1} parent=11 // pred_region
        _
      $region28: #{tpu_custom_call.1} parent=11 // pred_fallthru
        _
      // Predicated region
      $region29: #{tpu_custom_call.1} parent=11 // pred_check
        %p218 = pneg %p144
      $region30: #{tpu_custom_call.1} parent=11 // pred_check_branch
        %220 = sbr.rel (%p218) target = $region32
      $region31: #{tpu_custom_call.1} parent=11 // pred_region
        _
      $region32: #{tpu_custom_call.1} parent=11 // pred_fallthru
        _
      // Predicated region
      $region33: #{tpu_custom_call.1} parent=11 // pred_check
        %p221 = pneg %p165
      $region34: #{tpu_custom_call.1} parent=11 // pred_check_branch
        %223 = sbr.rel (%p221) target = $region36
      $region35: #{tpu_custom_call.1} parent=11 // pred_region
        _
      $region36: #{tpu_custom_call.1} parent=11 // pred_fallthru
        _
    $region12: #{tpu_custom_call.1} parent=5 // pred_fallthru
      _
    %p224 = scmp.lt.s32.totalorder %s13, 2
    // Predicated region
    $region37: #{tpu_custom_call.1} parent=5 // pred_check
      %p225 = pneg %p224
    $region38: #{tpu_custom_call.1} parent=5 // pred_check_branch
      %227 = sbr.rel (%p225) target = $region40
    $region39: #{tpu_custom_call.1} parent=5 // pred_region
      // Predicated region
      $region41: #{tpu_custom_call.1} parent=39 // pred_check
        %p228 = pneg %p33
      $region42: #{tpu_custom_call.1} parent=39 // pred_check_branch
        %230 = sbr.rel (%p228) target = $region44
      $region43: #{tpu_custom_call.1} parent=39 // pred_region
        %p231 = scmp.lt.s32.totalorder %s13, 1
        %s232 = scalar_select %p231, %s13, 1
        %s233 = smul.addr %s232, 8
        %s234 = scalar_lea.vmem %s0, %s233
      $region44: #{tpu_custom_call.1} parent=39 // pred_fallthru
        _
    $region40: #{tpu_custom_call.1} parent=5 // pred_fallthru
      _
    %p235 = scmp.le.s32.totalorder 1, %s13
    %p236 = scmp.lt.s32.totalorder %s13, 3
    %p237 = pnand %p235, %p236
    %p238 = pneg %p237
    // Predicated region
    $region45: #{tpu_custom_call.1} parent=5 // pred_check
      _
    $region46: #{tpu_custom_call.1} parent=5 // pred_check_branch
      %240 = sbr.rel (%p237) target = $region48
    $region47: #{tpu_custom_call.1} parent=5 // pred_region
      %s241 = ssub.s32 %s13, 1
      %p242 = scmp.lt.s32.totalorder %s18, 1
      %s243 = scalar_select %p242, %s18, 1
      %s244 = smul.addr %s243, 8
      %s245 = scalar_lea.vmem %s0, %s244
      %p246 = pneg %p39
      %p247 = pneg %p36
      %p248 = pneg %p60
      %p249 = pneg %p57
      %p250 = pneg %p81
      %p251 = pneg %p78
      %p252 = pneg %p102
      %p253 = pneg %p99
      %p254 = pneg %p123
      %p255 = pneg %p120
      %p256 = pneg %p144
      %p257 = pneg %p141
      %p258 = pneg %p165
      %p259 = pneg %p162
      %p260 = pneg %p191
      %p261 = pneg %p188
      %p262 = scmp.lt.s32.totalorder %s18, 1
      %s263 = scalar_select %p262, %s18, 1
      %s264 = smul.addr %s263, 8
      %s265 = scalar_lea.vmem %s7, %s264
      %p266 = scmp.lt.s32.totalorder %s18, 1
      %s267 = scalar_select %p266, %s18, 1
      %s268 = smul.addr %s267, 8
      %s269 = scalar_lea.vmem %s0, %s268
      %p270 = scmp.lt.s32.totalorder %s18, 1
      %s271 = scalar_select %p270, %s18, 1
      %s272 = smul.addr %s271, 8
      %s273 = scalar_lea.vmem %s7, %s272
      %v274 = vld [vmem:[%s269] sm:$0xff]
      %v275 = vld [vmem:[%s1] sm:$0xff]
      %v276 = vld [vmem:[%s2] sm:$0x1]
      %v278 = vlaneseq
      %v279 = vshrl.u32 %v278, 7
      %v280 = vsub.s32 0, %v279
      %v281 = vrot.slane %v276, %v280
      %vm283 = vcmask 64512
      %v285 = vsel %vm283, %v274, 0
      %287 = vmatprep.subr.mxu0 0.0
      %288 = vmatpush1.msra.mxu0 0.0
      %289 = vmatprep.subr.mxu0 0.0
      %290 = vmatpush1.msra.mxu0 0.0
      %291 = vmatprep.subr.mxu0 0.0
      %292 = vmatpush1.msra.mxu0 0.0
      %293 = vmatprep.subr.mxu0 0.0
      %294 = vmatpush1.msra.mxu0 0.0
      %295 = vmatprep.subr.mxu0 0.0
      %296 = vmatpush1.msra.mxu0 0.0
      %297 = vmatprep.subr.mxu0 0.0
      %298 = vmatpush1.msra.mxu0 0.0
      %299 = vmatprep.subr.mxu0 0.0
      %300 = vmatpush1.msra.mxu0 0.0
      %301 = vmatprep.subr.mxu0 0.0
      %302 = vmatpush1.msra.mxu0 0.0
      %303 = vmatprep.subr.mxu0 0.0
      %304 = vmatpush1.msra.mxu0 0.0
      %305 = vmatprep.subr.mxu0 0.0
      %306 = vmatpush1.msra.mxu0 0.0
      %307 = vmatprep.subr.mxu0 0.0
      %308 = vmatpush1.msra.mxu0 0.0
      %309 = vmatprep.subr.mxu0 0.0
      %310 = vmatpush1.msra.mxu0 0.0
      %311 = vmatprep.subr.mxu0 0.0
      %312 = vmatpush1.msra.mxu0 0.0
      %313 = vmatprep.subr.mxu0 0.0
      %314 = vmatpush1.msra.mxu0 0.0
      %315 = vmatprep.subr.mxu0 0.0
      %316 = vmatpush1.msra.mxu0 0.0
      %317 = vmatprep.subr.mxu0 0.0
      %318 = vmatpush1.msra.mxu0 %v275
      %319 = vmatprep.subr.mxu0 0.0
      %320 = vmatpush2.msra.mxu0 0.0
      %321 = vmatprep.subr.mxu0 0.0
      %322 = vmatpush2.msra.mxu0 0.0
      %323 = vmatprep.subr.mxu0 0.0
      %324 = vmatpush2.msra.mxu0 0.0
      %325 = vmatprep.subr.mxu0 0.0
      %326 = vmatpush2.msra.mxu0 0.0
      %327 = vmatprep.subr.mxu0 0.0
      %328 = vmatpush2.msra.mxu0 0.0
      %329 = vmatprep.subr.mxu0 0.0
      %330 = vmatpush2.msra.mxu0 0.0
      %331 = vmatprep.subr.mxu0 0.0
      %332 = vmatpush2.msra.mxu0 0.0
      %333 = vmatprep.subr.mxu0 0.0
      %334 = vmatpush2.msra.mxu0 0.0
      %335 = vmatprep.subr.mxu0 0.0
      %336 = vmatpush2.msra.mxu0 0.0
      %337 = vmatprep.subr.mxu0 0.0
      %338 = vmatpush2.msra.mxu0 0.0
      %339 = vmatprep.subr.mxu0 0.0
      %340 = vmatpush2.msra.mxu0 0.0
      %341 = vmatprep.subr.mxu0 0.0
      %342 = vmatpush2.msra.mxu0 0.0
      %343 = vmatprep.subr.mxu0 0.0
      %344 = vmatpush2.msra.mxu0 0.0
      %345 = vmatprep.subr.mxu0 0.0
      %346 = vmatpush2.msra.mxu0 0.0
      %347 = vmatprep.subr.mxu0 0.0
      %348 = vmatpush2.msra.mxu0 0.0
      %349 = vmatprep.subr.mxu0 0.0
      %350 = vmatpush2.msra.mxu0 0.0
      %351 = vmatprep.mubr.f32.mxu0 0.0
      %352 = vmatmul.mubr.f32.gmra.mxu0 %v285
      %v353 = vpop.f32.mrf.mxu0
      %v354 = vadd.f32 %v281, %v353
      %v355 = vpop.f32.mrf.mxu0
      %356 = vdwg.mxu0
      %v357 = vmax.f32 %v354, 0.0
      %v358 = vld [vmem:[%s3] sm:$0xff]
      %v359 = vld [vmem:[%s3 + $0x8] sm:$0xff]
      %v360 = vld [vmem:[%s3 + $0x10] sm:$0xff]
      %v361 = vld [vmem:[%s3 + $0x18] sm:$0xff]
      %v362 = vld [vmem:[%s3 + $0x20] sm:$0xff]
      %v363 = vld [vmem:[%s3 + $0x28] sm:$0xff]
      %v364 = vld [vmem:[%s3 + $0x30] sm:$0xff]
      %v365 = vld [vmem:[%s3 + $0x38] sm:$0xff]
      %v366 = vld [vmem:[%s3 + $0x40] sm:$0xff]
      %v367 = vld [vmem:[%s3 + $0x48] sm:$0xff]
      %v368 = vld [vmem:[%s3 + $0x50] sm:$0xff]
      %v369 = vld [vmem:[%s3 + $0x58] sm:$0xff]
      %v370 = vld [vmem:[%s3 + $0x60] sm:$0xff]
      %v371 = vld [vmem:[%s3 + $0x68] sm:$0xff]
      %v372 = vld [vmem:[%s3 + $0x70] sm:$0xff]
      %v373 = vld [vmem:[%s3 + $0x78] sm:$0xff]
      %v374 = vld [vmem:[%s4] sm:$0x1]
      %v376 = vlaneseq
      %v377 = vshrl.u32 %v376, 7
      %v378 = vsub.s32 0, %v377
      %v379 = vrot.slane %v374, %v378
      %381 = vmatprep.subr.mxu0 0.0
      %382 = vmatpush1.msra.mxu0 %v373
      %383 = vmatprep.subr.mxu0 0.0
      %384 = vmatpush1.msra.mxu0 %v372
      %385 = vmatprep.subr.mxu0 0.0
      %386 = vmatpush1.msra.mxu0 %v371
      %387 = vmatprep.subr.mxu0 0.0
      %388 = vmatpush1.msra.mxu0 %v370
      %389 = vmatprep.subr.mxu0 0.0
      %390 = vmatpush1.msra.mxu0 %v369
      %391 = vmatprep.subr.mxu0 0.0
      %392 = vmatpush1.msra.mxu0 %v368
      %393 = vmatprep.subr.mxu0 0.0
      %394 = vmatpush1.msra.mxu0 %v367
      %395 = vmatprep.subr.mxu0 0.0
      %396 = vmatpush1.msra.mxu0 %v366
      %397 = vmatprep.subr.mxu0 0.0
      %398 = vmatpush1.msra.mxu0 %v365
      %399 = vmatprep.subr.mxu0 0.0
      %400 = vmatpush1.msra.mxu0 %v364
      %401 = vmatprep.subr.mxu0 0.0
      %402 = vmatpush1.msra.mxu0 %v363
      %403 = vmatprep.subr.mxu0 0.0
      %404 = vmatpush1.msra.mxu0 %v362
      %405 = vmatprep.subr.mxu0 0.0
      %406 = vmatpush1.msra.mxu0 %v361
      %407 = vmatprep.subr.mxu0 0.0
      %408 = vmatpush1.msra.mxu0 %v360
      %409 = vmatprep.subr.mxu0 0.0
      %410 = vmatpush1.msra.mxu0 %v359
      %411 = vmatprep.subr.mxu0 0.0
      %412 = vmatpush1.msra.mxu0 %v358
      %413 = vmatprep.subr.mxu0 0.0
      %414 = vmatpush2.msra.mxu0 0.0
      %415 = vmatprep.subr.mxu0 0.0
      %416 = vmatpush2.msra.mxu0 0.0
      %417 = vmatprep.subr.mxu0 0.0
      %418 = vmatpush2.msra.mxu0 0.0
      %419 = vmatprep.subr.mxu0 0.0
      %420 = vmatpush2.msra.mxu0 0.0
      %421 = vmatprep.subr.mxu0 0.0
      %422 = vmatpush2.msra.mxu0 0.0
      %423 = vmatprep.subr.mxu0 0.0
      %424 = vmatpush2.msra.mxu0 0.0
      %425 = vmatprep.subr.mxu0 0.0
      %426 = vmatpush2.msra.mxu0 0.0
      %427 = vmatprep.subr.mxu0 0.0
      %428 = vmatpush2.msra.mxu0 0.0
      %429 = vmatprep.subr.mxu0 0.0
      %430 = vmatpush2.msra.mxu0 0.0
      %431 = vmatprep.subr.mxu0 0.0
      %432 = vmatpush2.msra.mxu0 0.0
      %433 = vmatprep.subr.mxu0 0.0
      %434 = vmatpush2.msra.mxu0 0.0
      %435 = vmatprep.subr.mxu0 0.0
      %436 = vmatpush2.msra.mxu0 0.0
      %437 = vmatprep.subr.mxu0 0.0
      %438 = vmatpush2.msra.mxu0 0.0
      %439 = vmatprep.subr.mxu0 0.0
      %440 = vmatpush2.msra.mxu0 0.0
      %441 = vmatprep.subr.mxu0 0.0
      %442 = vmatpush2.msra.mxu0 0.0
      %443 = vmatprep.subr.mxu0 0.0
      %444 = vmatpush2.msra.mxu0 0.0
      %445 = vmatprep.mubr.f32.mxu0 0.0
      %446 = vmatmul.mubr.f32.gmra.mxu0 %v357
      %v447 = vpop.f32.mrf.mxu0
      %v448 = vadd.f32 %v379, %v447
      %v449 = vpop.f32.mrf.mxu0
      %450 = vdwg.mxu0
      %v451 = vmax.f32 %v448, 0.0
      %v452 = vld [vmem:[%s5] sm:$0xff]
      %v453 = vld [vmem:[%s5 + $0x8] sm:$0xff]
      %v454 = vld [vmem:[%s5 + $0x10] sm:$0xff]
      %v455 = vld [vmem:[%s5 + $0x18] sm:$0xff]
      %v456 = vld [vmem:[%s5 + $0x20] sm:$0xff]
      %v457 = vld [vmem:[%s5 + $0x28] sm:$0xff]
      %v458 = vld [vmem:[%s5 + $0x30] sm:$0xff]
      %v459 = vld [vmem:[%s5 + $0x38] sm:$0xff]
      %v460 = vld [vmem:[%s5 + $0x40] sm:$0xff]
      %v461 = vld [vmem:[%s5 + $0x48] sm:$0xff]
      %v462 = vld [vmem:[%s5 + $0x50] sm:$0xff]
      %v463 = vld [vmem:[%s5 + $0x58] sm:$0xff]
      %v464 = vld [vmem:[%s5 + $0x60] sm:$0xff]
      %v465 = vld [vmem:[%s5 + $0x68] sm:$0xff]
      %v466 = vld [vmem:[%s5 + $0x70] sm:$0xff]
      %v467 = vld [vmem:[%s5 + $0x78] sm:$0xff]
      %v468 = vld [vmem:[%s6] sm:$0x1]
      %v470 = vlaneseq
      %v471 = vshrl.u32 %v470, 7
      %v472 = vsub.s32 0, %v471
      %v473 = vrot.slane %v468, %v472
      %475 = vmatprep.subr.mxu0 0.0
      %476 = vmatpush1.msra.mxu0 %v467
      %477 = vmatprep.subr.mxu0 0.0
      %478 = vmatpush1.msra.mxu0 %v466
      %479 = vmatprep.subr.mxu0 0.0
      %480 = vmatpush1.msra.mxu0 %v465
      %481 = vmatprep.subr.mxu0 0.0
      %482 = vmatpush1.msra.mxu0 %v464
      %483 = vmatprep.subr.mxu0 0.0
      %484 = vmatpush1.msra.mxu0 %v463
      %485 = vmatprep.subr.mxu0 0.0
      %486 = vmatpush1.msra.mxu0 %v462
      %487 = vmatprep.subr.mxu0 0.0
      %488 = vmatpush1.msra.mxu0 %v461
      %489 = vmatprep.subr.mxu0 0.0
      %490 = vmatpush1.msra.mxu0 %v460
      %491 = vmatprep.subr.mxu0 0.0
      %492 = vmatpush1.msra.mxu0 %v459
      %493 = vmatprep.subr.mxu0 0.0
      %494 = vmatpush1.msra.mxu0 %v458
      %495 = vmatprep.subr.mxu0 0.0
      %496 = vmatpush1.msra.mxu0 %v457
      %497 = vmatprep.subr.mxu0 0.0
      %498 = vmatpush1.msra.mxu0 %v456
      %499 = vmatprep.subr.mxu0 0.0
      %500 = vmatpush1.msra.mxu0 %v455
      %501 = vmatprep.subr.mxu0 0.0
      %502 = vmatpush1.msra.mxu0 %v454
      %503 = vmatprep.subr.mxu0 0.0
      %504 = vmatpush1.msra.mxu0 %v453
      %505 = vmatprep.subr.mxu0 0.0
      %506 = vmatpush1.msra.mxu0 %v452
      %507 = vmatprep.subr.mxu0 0.0
      %508 = vmatpush2.msra.mxu0 0.0
      %509 = vmatprep.subr.mxu0 0.0
      %510 = vmatpush2.msra.mxu0 0.0
      %511 = vmatprep.subr.mxu0 0.0
      %512 = vmatpush2.msra.mxu0 0.0
      %513 = vmatprep.subr.mxu0 0.0
      %514 = vmatpush2.msra.mxu0 0.0
      %515 = vmatprep.subr.mxu0 0.0
      %516 = vmatpush2.msra.mxu0 0.0
      %517 = vmatprep.subr.mxu0 0.0
      %518 = vmatpush2.msra.mxu0 0.0
      %519 = vmatprep.subr.mxu0 0.0
      %520 = vmatpush2.msra.mxu0 0.0
      %521 = vmatprep.subr.mxu0 0.0
      %522 = vmatpush2.msra.mxu0 0.0
      %523 = vmatprep.subr.mxu0 0.0
      %524 = vmatpush2.msra.mxu0 0.0
      %525 = vmatprep.subr.mxu0 0.0
      %526 = vmatpush2.msra.mxu0 0.0
      %527 = vmatprep.subr.mxu0 0.0
      %528 = vmatpush2.msra.mxu0 0.0
      %529 = vmatprep.subr.mxu0 0.0
      %530 = vmatpush2.msra.mxu0 0.0
      %531 = vmatprep.subr.mxu0 0.0
      %532 = vmatpush2.msra.mxu0 0.0
      %533 = vmatprep.subr.mxu0 0.0
      %534 = vmatpush2.msra.mxu0 0.0
      %535 = vmatprep.subr.mxu0 0.0
      %536 = vmatpush2.msra.mxu0 0.0
      %537 = vmatprep.subr.mxu0 0.0
      %538 = vmatpush2.msra.mxu0 0.0
      %539 = vmatprep.mubr.f32.mxu0 0.0
      %540 = vmatmul.mubr.f32.gmra.mxu0 %v451
      %v541 = vpop.f32.mrf.mxu0
      %v542 = vadd.f32 %v473, %v541
      %v543 = vpop.f32.mrf.mxu0
      %544 = vdwg.mxu0
      %v545 = vtanh.pop %v542
      %v546 = vmul.f32 %v545, 2.0
      %v547 = vmax.f32 %v542, 0.0
      %v548 = vand.u32 2147483647, %v542
      %v549 = vsub.f32 0.0, %v548
      %v550 = vmul.f32 %v549, 1.442695
      %v551 = vpow.pop %v550
      %v552 = vadd.f32 %v551, 1.0
      %v553 = vlog2.pop %v552
      %v554 = vmul.f32 %v553, 0.6931472
      %v555 = vmul.f32 -0.5, %v551
      %v556 = vadd.f32 %v555, 1.0
      %v557 = vmul.f32 %v556, %v551
      %v558 = vand.u32 2147483647, %v551
      %vm559 = vcmp.lt.f32.partialorder %v558, 0.0004427343
      %v560 = vsel %vm559, %v557, %v554
      %v561 = vadd.f32 %v547, %v560
      %v562 = vadd.f32 %v561, 0.001
      %v563 = vmax.f32 %v562, 0.01
      %v564 = vmin.f32 %v563, 1.0
      %v565 = vlaneseq
      %v566 = vand.u32 %v565, 127
      %vm567 = vcmp.lt.s32.totalorder %v566, 4
      %v568 = vsel %vm567, 1, 0
      %vm569 = vcmp.eq.s32.totalorder %v568, 1
      %v570 = vsel %vm569, %v546, %v564
      %571 = vst.msk [vmem:[%s273] sm:$0xff] %vm283, %v570
      %p572 = scmp.lt.s32.totalorder %s18, 1
      %s573 = scalar_select %p572, %s18, 1
      %s574 = smul.addr %s573, 8
      %s575 = scalar_lea.vmem %s7, %s574
      // Predicated region
      $region49: #{tpu_custom_call.1} parent=47 // pred_check
        %p576 = pneg %p188
      $region50: #{tpu_custom_call.1} parent=47 // pred_check_branch
        %578 = sbr.rel (%p576) target = $region52
      $region51: #{tpu_custom_call.1} parent=47 // pred_region
        _
      $region52: #{tpu_custom_call.1} parent=47 // pred_fallthru
        _
    $region48: #{tpu_custom_call.1} parent=5 // pred_fallthru
      _
    %p579 = scmp.le.s32.totalorder 2, %s13
    // Predicated region
    $region53: #{tpu_custom_call.1} parent=5 // pred_check
      %p580 = pneg %p579
    $region54: #{tpu_custom_call.1} parent=5 // pred_check_branch
      %582 = sbr.rel (%p580) target = $region56
    $region55: #{tpu_custom_call.1} parent=5 // pred_region
      %s583 = ssub.s32 %s13, 2
      // Predicated region
      $region57: #{tpu_custom_call.1} parent=55 // pred_check
        %p584 = pneg %p194
      $region58: #{tpu_custom_call.1} parent=55 // pred_check_branch
        %586 = sbr.rel (%p584) target = $region60
      $region59: #{tpu_custom_call.1} parent=55 // pred_region
        %p587 = scmp.lt.s32.totalorder %s19, 1
        %s588 = scalar_select %p587, %s19, 1
        %s589 = smul.addr %s588, 8
        %s590 = scalar_lea.vmem %s7, %s589
      $region60: #{tpu_custom_call.1} parent=55 // pred_fallthru
        _
    $region56: #{tpu_custom_call.1} parent=5 // pred_fallthru
      _
  $region6: #{tpu_custom_call.1} parent=0 // loop_footer
    %s17 = sadd.s32 1, %s13
  $region7: #{tpu_custom_call.1} parent=0 // loop_footer_branch
    %12 = sbr.rel target = $region3
  $region8: #{tpu_custom_call.1} parent=0 // loop_exit
    _

</llo_original>
